<compile_context>
chip_gen: v7x
topology: tpu7x:2x2x1
jax: 0.10.0
libtpu: 0.0.40
codegen_flags: <defaults>
</compile_context>

<pallas_src>
import functools

import jax
import jax.numpy as jnp
from jax.experimental import pallas as pl
from jax.experimental.pallas import tpu as pltpu


# -----------------------------------------------------------------------------
# Pallas kernel
# -----------------------------------------------------------------------------
def _cehr_embed_kernel(
    word_ref,    # [TM, H]   bf16  word embeddings
    ta_ref,      # [TM, 2]   f32   (time_delta, age) pairs
    other_ref,   # [TM, H]   bf16  token_type + position + visit_order + visit_seg
    wphi_ref,    # [3, 2T]   f32   rows: [time_w|0], [0|age_w], [time_phi|age_phi]
    Ww_ref,      # [H, H]    bf16  scale_back weight slice acting on word embeds
    Wta_ref,     # [2T, H]   bf16  scale_back weight slice acting on [time|age]
    b_ref,       # [1, H]    f32   scale_back bias
    g_ref,       # [1, H]    f32   LayerNorm gamma
    beta_ref,    # [1, H]    f32   LayerNorm beta
    out_ref,     # [TM, H]   f32
    *,
    eps: float,
):
    ta = ta_ref[...]                                   # [TM, 2]
    ts = ta[:, 0:1]                                    # [TM, 1]
    age = ta[:, 1:2]                                   # [TM, 1]

    # TimeEmbeddingLayer for time delta & age, built directly at [TM, 2T]
    # (VPU broadcasts + EUP sin; no lane-axis concatenate).
    arg = ts * wphi_ref[0:1, :] + age * wphi_ref[1:2, :] + wphi_ref[2:3, :]
    ta_emb = jnp.sin(arg)                              # [TM, 2T]

    # scale_back_concat_layer on concat([word, t_emb, a_emb]) as a split matmul
    # (bf16 MXU, f32 accumulation).
    lin = (
        jnp.dot(word_ref[...], Ww_ref[...], preferred_element_type=jnp.float32)
        + jnp.dot(ta_emb.astype(jnp.bfloat16), Wta_ref[...],
                  preferred_element_type=jnp.float32)
        + b_ref[...]
    )

    x = jnp.tanh(lin) + other_ref[...].astype(jnp.float32)       # [TM, H]

    # One-pass LayerNorm over the hidden (lane) axis, biased variance
    # (PyTorch semantics).
    mu = jnp.mean(x, axis=-1, keepdims=True)
    ex2 = jnp.mean(x * x, axis=-1, keepdims=True)
    var = jnp.maximum(ex2 - mu * mu, 0.0)
    inv = jax.lax.rsqrt(var + eps)
    out_ref[...] = (x - mu) * inv * g_ref[...] + beta_ref[...]


# -----------------------------------------------------------------------------
# Row tiling: pad rows to a multiple of TM; keep grid >= 2 when rows allow it
# -----------------------------------------------------------------------------
def _choose_row_tiling(n_rows: int, target_rows: int = 512):
    n8 = ((n_rows + 7) // 8) * 8                 # pad to sublane multiple
    tm = max(8, (min(target_rows, n8) // 8) * 8)
    n_padded = ((n8 + tm - 1) // tm) * tm
    if n_padded == tm and n_padded >= 16:        # split so both TCs get work
        tm = ((n_padded // 2 + 7) // 8) * 8
        n_padded = 2 * tm
    return n_padded, tm


# -----------------------------------------------------------------------------
# Wrapper: gathers + flattening in plain JAX, hot path in Pallas
# -----------------------------------------------------------------------------
def bigbird_embeddings_forward(
    params,
    input_ids,       # [B, S] int32
    time_stamps,     # [B, S] numeric
    ages,            # [B, S] numeric
    visit_orders,    # [B, S] int32
    visit_segments,  # [B, S] int32
    *,
    hidden_size,
    time_embeddings_size,
    layer_norm_eps=1e-12,
    rescale_embeddings=False,
    target_row_tile=512,
):
    """Eval-mode forward (dropout is identity)."""
    B, S = input_ids.shape
    H = hidden_size
    T = time_embeddings_size
    N = B * S

    # ---- embedding-table gathers (glue; pure index lookups) ----
    word = params["word_emb"][input_ids]                           # [B, S, H]
    pos = params["pos_emb"][jnp.arange(S, dtype=jnp.int32)]        # [S, H]
    type_row = params["type_emb"][0]                               # [H]  (token_type_ids == 0)
    vo = params["visit_order_emb"][visit_orders]                   # [B, S, H]
    vs = params["visit_seg_emb"][visit_segments]                   # [B, S, H]
    other = vo + vs + pos[None, :, :] + type_row[None, None, :]    # [B, S, H]

    # ---- time-delta preprocessing (is_time_delta=True for time stamps) ----
    ts = time_stamps.astype(jnp.float32)
    ts_delta = jnp.concatenate([ts[:, 0:1] * 0.0, ts[:, 1:] - ts[:, :-1]], axis=-1)
    ages_f = ages.astype(jnp.float32)

    # ---- flatten & cast row streams (bf16 halves HBM traffic) ----
    word2 = word.reshape(N, H).astype(jnp.bfloat16)
    other2 = other.reshape(N, H).astype(jnp.bfloat16)
    ta2 = jnp.stack([ts_delta.reshape(N), ages_f.reshape(N)], axis=-1)  # [N, 2] f32

    # ---- weights ----
    W = params["scale_W"].astype(jnp.float32)                      # [H + 2T, H]
    Ww = W[:H]
    if rescale_embeddings:
        Ww = Ww * (H ** 0.5)        # fold sqrt(H) rescale into the weight
    Ww = Ww.astype(jnp.bfloat16)                                   # [H, H]
    Wta = W[H:].astype(jnp.bfloat16)                               # [2T, H]
    b = params["scale_b"].reshape(1, H).astype(jnp.float32)
    gamma = params["ln_gamma"].reshape(1, H).astype(jnp.float32)
    beta = params["ln_beta"].reshape(1, H).astype(jnp.float32)

    # Packed sinusoid params: row0 = [time_w | 0], row1 = [0 | age_w],
    # row2 = [time_phi | age_phi]  ->  arg = ts*row0 + age*row1 + row2.
    zT = jnp.zeros((1, T), jnp.float32)
    wphi = jnp.concatenate(
        [
            jnp.concatenate([params["time_w"].astype(jnp.float32), zT], axis=-1),
            jnp.concatenate([zT, params["age_w"].astype(jnp.float32)], axis=-1),
            jnp.concatenate([params["time_phi"].astype(jnp.float32),
                             params["age_phi"].astype(jnp.float32)], axis=-1),
        ],
        axis=0,
    )                                                              # [3, 2T] f32

    # ---- row tiling with padding ----
    Np, TM = _choose_row_tiling(N, target_row_tile)
    pad = Np - N
    if pad:
        word2 = jnp.pad(word2, ((0, pad), (0, 0)))
        other2 = jnp.pad(other2, ((0, pad), (0, 0)))
        ta2 = jnp.pad(ta2, ((0, pad), (0, 0)))
    grid = (Np // TM,)

    row_spec = lambda c: pl.BlockSpec((TM, c), lambda i: (i, 0))
    const_spec = lambda r, c: pl.BlockSpec((r, c), lambda i: (0, 0))

    out = pl.pallas_call(
        functools.partial(_cehr_embed_kernel, eps=float(layer_norm_eps)),
        out_shape=jax.ShapeDtypeStruct((Np, H), jnp.float32),
        grid=grid,
        in_specs=[
            row_spec(H),           # word (bf16)
            row_spec(2),           # (time_delta, age) pairs (f32)
            row_spec(H),           # other embeds (bf16)
            const_spec(3, 2 * T),  # packed time/age w & phi
            const_spec(H, H),      # Ww (bf16)
            const_spec(2 * T, H),  # Wta (bf16)
            const_spec(1, H),      # bias
            const_spec(1, H),      # gamma
            const_spec(1, H),      # beta
        ],
        out_specs=row_spec(H),
        compiler_params=pltpu.CompilerParams(
            dimension_semantics=("parallel",),
            vmem_limit_bytes=48 * 1024 * 1024,   # above 16/32 MiB defaults, below all physical
        ),
    )(word2, ta2, other2, wphi, Ww, Wta, b, gamma, beta)

    return out[:N].reshape(B, S, H)


# -----------------------------------------------------------------------------
# Pure-JAX reference (f32, mirrors the PyTorch module, eval mode)
# -----------------------------------------------------------------------------
def _reference_forward(params, input_ids, time_stamps, ages, visit_orders,
                       visit_segments, *, hidden_size, time_embeddings_size,
                       layer_norm_eps, rescale_embeddings):
    H = hidden_size
    S = input_ids.shape[1]
    word = params["word_emb"][input_ids]
    if rescale_embeddings:
        word = word * (H ** 0.5)
    ts = time_stamps.astype(jnp.float32)
    ts_d = jnp.concatenate([ts[:, 0:1] * 0.0, ts[:, 1:] - ts[:, :-1]], axis=-1)
    t_emb = jnp.sin(ts_d[..., None] * params["time_w"][0] + params["time_phi"][0])
    a_emb = jnp.sin(ages.astype(jnp.float32)[..., None] * params["age_w"][0]
                    + params["age_phi"][0])
    x = jnp.concatenate([word, t_emb, a_emb], axis=-1)
    lin = jnp.tanh(x @ params["scale_W"] + params["scale_b"])
    emb = (lin
           + params["type_emb"][0][None, None, :]
           + params["pos_emb"][jnp.arange(S)][None]
           + params["visit_order_emb"][visit_orders]
           + params["visit_seg_emb"][visit_segments])
    mu = jnp.mean(emb, axis=-1, keepdims=True)
    var = jnp.mean((emb - mu) ** 2, axis=-1, keepdims=True)
    return ((emb - mu) / jnp.sqrt(var + layer_norm_eps)
            * params["ln_gamma"] + params["ln_beta"])


# -----------------------------------------------------------------------------
# Deterministic synthetic parameter construction
# -----------------------------------------------------------------------------
def make_params(key, *, vocab_size, hidden_size, max_position_embeddings,
                type_vocab_size, visit_order_size, time_embeddings_size,
                pad_token_id):
    H, T = hidden_size, time_embeddings_size
    ks = jax.random.split(key, 10)

    word_emb = 0.02 * jax.random.normal(ks[0], (vocab_size, H), jnp.float32)
    word_emb = word_emb.at[pad_token_id].set(0.0)  # padding_idx row zeroed

    pos_emb = 0.02 * jax.random.normal(ks[1], (max_position_embeddings, H), jnp.float32)
    type_emb = 0.02 * jax.random.normal(ks[2], (type_vocab_size, H), jnp.float32)
    visit_order_emb = 0.02 * jax.random.normal(ks[3], (max_position_embeddings, H), jnp.float32)
    visit_seg_emb = 0.02 * jax.random.normal(ks[4], (visit_order_size, H), jnp.float32)

    # xavier_uniform for (1, T) params: bound = sqrt(6 / (1 + T))
    xb = (6.0 / (1.0 + T)) ** 0.5
    time_w = jax.random.uniform(ks[5], (1, T), jnp.float32, -xb, xb)
    time_phi = jax.random.uniform(ks[6], (1, T), jnp.float32, -xb, xb)
    age_w = jax.random.uniform(ks[7], (1, T), jnp.float32, -xb, xb)
    age_phi = jax.random.uniform(ks[8], (1, T), jnp.float32, -xb, xb)

    fan_in = H + 2 * T
    lb = 1.0 / (fan_in ** 0.5)
    kW, kb = jax.random.split(ks[9])
    scale_W = jax.random.uniform(kW, (fan_in, H), jnp.float32, -lb, lb)
    scale_b = jax.random.uniform(kb, (H,), jnp.float32, -lb, lb)

    ln_gamma = jnp.ones((H,), jnp.float32)
    ln_beta = jnp.zeros((H,), jnp.float32)

    return dict(
        word_emb=word_emb, pos_emb=pos_emb, type_emb=type_emb,
        visit_order_emb=visit_order_emb, visit_seg_emb=visit_seg_emb,
        time_w=time_w, time_phi=time_phi, age_w=age_w, age_phi=age_phi,
        scale_W=scale_W, scale_b=scale_b, ln_gamma=ln_gamma, ln_beta=ln_beta,
    )


if __name__ == "__main__":
    # Small config consistent with the module
    vocab_size = 100
    hidden_size = 32
    max_position_embeddings = 64
    type_vocab_size = 2
    visit_order_size = 3
    time_embeddings_size = 16
    pad_token_id = 0
    layer_norm_eps = 1e-12
    rescale_embeddings = False

    B, S = 2, 8

    key = jax.random.PRNGKey(0)
    kp, k1, k2, k3, k4, k5 = jax.random.split(key, 6)

    params = make_params(
        kp,
        vocab_size=vocab_size,
        hidden_size=hidden_size,
        max_position_embeddings=max_position_embeddings,
        type_vocab_size=type_vocab_size,
        visit_order_size=visit_order_size,
        time_embeddings_size=time_embeddings_size,
        pad_token_id=pad_token_id,
    )

    input_ids = jax.random.randint(k1, (B, S), 0, vocab_size, dtype=jnp.int32)
    time_stamps = jnp.cumsum(
        jax.random.uniform(k2, (B, S), jnp.float32, 0.0, 10.0), axis=-1
    )
    ages = jax.random.uniform(k3, (B, S), jnp.float32, 20.0, 80.0)
    visit_orders = jax.random.randint(
        k4, (B, S), 0, max_position_embeddings, dtype=jnp.int32
    )
    visit_segments = jax.random.randint(
        k5, (B, S), 0, visit_order_size, dtype=jnp.int32
    )

    out = bigbird_embeddings_forward(
        params,
        input_ids,
        time_stamps,
        ages,
        visit_orders,
        visit_segments,
        hidden_size=hidden_size,
        time_embeddings_size=time_embeddings_size,
        layer_norm_eps=layer_norm_eps,
        rescale_embeddings=rescale_embeddings,
    )
    jax.block_until_ready(out)

    assert out.shape == (B, S, hidden_size)
    assert bool(jnp.all(jnp.isfinite(out)))

    ref = _reference_forward(
        params, input_ids, time_stamps, ages, visit_orders, visit_segments,
        hidden_size=hidden_size, time_embeddings_size=time_embeddings_size,
        layer_norm_eps=layer_norm_eps, rescale_embeddings=rescale_embeddings,
    )
    # bf16 row streams + bf16 MXU matmuls -> loose but safe tolerance.
    assert float(jnp.max(jnp.abs(out - ref))) < 0.1

    print("KERNEL_OK")
</pallas_src>

<mosaic_0001>
module attributes {stable_mosaic.version = 11 : i64} {
  func.func @_cehr_embed_kernel(%arg0: i32, %arg1: memref<8x32xbf16, #tpu.memory_space<vmem>>, %arg2: memref<8x2xf32, #tpu.memory_space<vmem>>, %arg3: memref<8x32xbf16, #tpu.memory_space<vmem>>, %arg4: memref<3x32xf32, #tpu.memory_space<vmem>>, %arg5: memref<32x32xbf16, #tpu.memory_space<vmem>>, %arg6: memref<32x32xbf16, #tpu.memory_space<vmem>>, %arg7: memref<1x32xf32, #tpu.memory_space<vmem>>, %arg8: memref<1x32xf32, #tpu.memory_space<vmem>>, %arg9: memref<1x32xf32, #tpu.memory_space<vmem>>, %arg10: memref<8x32xf32, #tpu.memory_space<vmem>>) attributes {dimension_semantics = [#tpu.dimension_semantics<parallel>], iteration_bounds = array<i64: 2>, scalar_prefetch = 0 : i64, scratch_operands = 0 : i64, tpu.core_type = #tpu.core_type<tc>, window_params = [{transform_indices = @transform_0, window_bounds = array<i64: 8, 32>}, {transform_indices = @transform_1, window_bounds = array<i64: 8, 2>}, {transform_indices = @transform_2, window_bounds = array<i64: 8, 32>}, {pipeline_mode = #tpu.pipeline_mode<synchronous>, transform_indices = @transform_3, window_bounds = array<i64: 3, 32>}, {pipeline_mode = #tpu.pipeline_mode<synchronous>, transform_indices = @transform_4, window_bounds = array<i64: 32, 32>}, {pipeline_mode = #tpu.pipeline_mode<synchronous>, transform_indices = @transform_5, window_bounds = array<i64: 32, 32>}, {pipeline_mode = #tpu.pipeline_mode<synchronous>, transform_indices = @transform_6, window_bounds = array<i64: 1, 32>}, {pipeline_mode = #tpu.pipeline_mode<synchronous>, transform_indices = @transform_7, window_bounds = array<i64: 1, 32>}, {pipeline_mode = #tpu.pipeline_mode<synchronous>, transform_indices = @transform_8, window_bounds = array<i64: 1, 32>}, {transform_indices = @transform_9, window_bounds = array<i64: 8, 32>}]} {
    %c0 = arith.constant 0 : index
    %c0_0 = arith.constant 0 : index
    %0 = vector.load %arg2[%c0, %c0_0] : memref<8x2xf32, #tpu.memory_space<vmem>>, vector<8x2xf32>
    %1 = vector.extract_strided_slice %0 {offsets = [0, 0], sizes = [8, 1], strides = [1, 1]} : vector<8x2xf32> to vector<8x1xf32>
    %2 = vector.extract_strided_slice %0 {offsets = [0, 1], sizes = [8, 1], strides = [1, 1]} : vector<8x2xf32> to vector<8x1xf32>
    %c0_1 = arith.constant 0 : index
    %c0_2 = arith.constant 0 : index
    %3 = vector.load %arg4[%c0_1, %c0_2] : memref<3x32xf32, #tpu.memory_space<vmem>>, vector<1x32xf32>
    %4 = vector.broadcast %1 : vector<8x1xf32> to vector<8x32xf32>
    %5 = vector.broadcast %3 : vector<1x32xf32> to vector<8x32xf32>
    %6 = arith.mulf %4, %5 : vector<8x32xf32>
    %c1 = arith.constant 1 : index
    %c0_3 = arith.constant 0 : index
    %7 = vector.load %arg4[%c1, %c0_3] : memref<3x32xf32, #tpu.memory_space<vmem>>, vector<1x32xf32>
    %8 = vector.broadcast %2 : vector<8x1xf32> to vector<8x32xf32>
    %9 = vector.broadcast %7 : vector<1x32xf32> to vector<8x32xf32>
    %10 = arith.mulf %8, %9 : vector<8x32xf32>
    %11 = arith.addf %6, %10 : vector<8x32xf32>
    %c2 = arith.constant 2 : index
    %c0_4 = arith.constant 0 : index
    %12 = vector.load %arg4[%c2, %c0_4] : memref<3x32xf32, #tpu.memory_space<vmem>>, vector<1x32xf32>
    %13 = vector.broadcast %12 : vector<1x32xf32> to vector<8x32xf32>
    %14 = arith.addf %11, %13 : vector<8x32xf32>
    %15 = math.sin %14 : vector<8x32xf32>
    %c0_5 = arith.constant 0 : index
    %c0_6 = arith.constant 0 : index
    %16 = vector.load %arg1[%c0_5, %c0_6] : memref<8x32xbf16, #tpu.memory_space<vmem>>, vector<8x32xbf16>
    %c0_7 = arith.constant 0 : index
    %c0_8 = arith.constant 0 : index
    %17 = vector.load %arg5[%c0_7, %c0_8] : memref<32x32xbf16, #tpu.memory_space<vmem>>, vector<32x32xbf16>
    %cst = arith.constant dense<0.000000e+00> : vector<8x32xf32>
    %18 = tpu.matmul %16, %17, %cst {dimension_numbers = #tpu.dot_dimension_numbers<[1], [0], [0], [1], [0, 0, 1, 1], [], []>} : vector<8x32xbf16>, vector<32x32xbf16>, vector<8x32xf32> -> vector<8x32xf32>
    %19 = arith.truncf %15 : vector<8x32xf32> to vector<8x32xbf16>
    %c0_9 = arith.constant 0 : index
    %c0_10 = arith.constant 0 : index
    %20 = vector.load %arg6[%c0_9, %c0_10] : memref<32x32xbf16, #tpu.memory_space<vmem>>, vector<32x32xbf16>
    %cst_11 = arith.constant dense<0.000000e+00> : vector<8x32xf32>
    %21 = tpu.matmul %19, %20, %cst_11 {dimension_numbers = #tpu.dot_dimension_numbers<[1], [0], [0], [1], [0, 0, 1, 1], [], []>} : vector<8x32xbf16>, vector<32x32xbf16>, vector<8x32xf32> -> vector<8x32xf32>
    %22 = arith.addf %18, %21 : vector<8x32xf32>
    %c0_12 = arith.constant 0 : index
    %c0_13 = arith.constant 0 : index
    %23 = vector.load %arg7[%c0_12, %c0_13] : memref<1x32xf32, #tpu.memory_space<vmem>>, vector<1x32xf32>
    %24 = vector.broadcast %23 : vector<1x32xf32> to vector<8x32xf32>
    %25 = arith.addf %22, %24 : vector<8x32xf32>
    %26 = math.tanh %25 : vector<8x32xf32>
    %c0_14 = arith.constant 0 : index
    %c0_15 = arith.constant 0 : index
    %27 = vector.load %arg3[%c0_14, %c0_15] : memref<8x32xbf16, #tpu.memory_space<vmem>>, vector<8x32xbf16>
    %28 = arith.extf %27 : vector<8x32xbf16> to vector<8x32xf32>
    %29 = arith.addf %26, %28 : vector<8x32xf32>
    %cst_16 = arith.constant dense<0.000000e+00> : vector<8xf32>
    %30 = vector.multi_reduction <add>, %29, %cst_16 [1] : vector<8x32xf32> to vector<8xf32>
    %31 = vector.shape_cast %30 : vector<8xf32> to vector<8x1xf32>
    %cst_17 = arith.constant 3.200000e+01 : f32
    %32 = vector.broadcast %cst_17 : f32 to vector<8x1xf32>
    %33 = arith.divf %31, %32 : vector<8x1xf32>
    %34 = arith.mulf %29, %29 : vector<8x32xf32>
    %cst_18 = arith.constant dense<0.000000e+00> : vector<8xf32>
    %35 = vector.multi_reduction <add>, %34, %cst_18 [1] : vector<8x32xf32> to vector<8xf32>
    %36 = vector.shape_cast %35 : vector<8xf32> to vector<8x1xf32>
    %cst_19 = arith.constant 3.200000e+01 : f32
    %37 = vector.broadcast %cst_19 : f32 to vector<8x1xf32>
    %38 = arith.divf %36, %37 : vector<8x1xf32>
    %39 = arith.mulf %33, %33 : vector<8x1xf32>
    %40 = arith.subf %38, %39 : vector<8x1xf32>
    %cst_20 = arith.constant 0.000000e+00 : f32
    %41 = vector.broadcast %cst_20 : f32 to vector<8x1xf32>
    %42 = arith.maximumf %40, %41 : vector<8x1xf32>
    %cst_21 = arith.constant 9.99999996E-13 : f32
    %43 = vector.broadcast %cst_21 : f32 to vector<8x1xf32>
    %44 = arith.addf %42, %43 : vector<8x1xf32>
    %45 = math.rsqrt %44 : vector<8x1xf32>
    %46 = vector.broadcast %33 : vector<8x1xf32> to vector<8x32xf32>
    %47 = arith.subf %29, %46 : vector<8x32xf32>
    %48 = vector.broadcast %45 : vector<8x1xf32> to vector<8x32xf32>
    %49 = arith.mulf %47, %48 : vector<8x32xf32>
    %c0_22 = arith.constant 0 : index
    %c0_23 = arith.constant 0 : index
    %50 = vector.load %arg8[%c0_22, %c0_23] : memref<1x32xf32, #tpu.memory_space<vmem>>, vector<1x32xf32>
    %51 = vector.broadcast %50 : vector<1x32xf32> to vector<8x32xf32>
    %52 = arith.mulf %49, %51 : vector<8x32xf32>
    %c0_24 = arith.constant 0 : index
    %c0_25 = arith.constant 0 : index
    %53 = vector.load %arg9[%c0_24, %c0_25] : memref<1x32xf32, #tpu.memory_space<vmem>>, vector<1x32xf32>
    %54 = vector.broadcast %53 : vector<1x32xf32> to vector<8x32xf32>
    %55 = arith.addf %52, %54 : vector<8x32xf32>
    %c0_26 = arith.constant 0 : index
    %c0_27 = arith.constant 0 : index
    %56 = vector.load %arg10[%c0_26, %c0_27] : memref<8x32xf32, #tpu.memory_space<vmem>>, vector<8x32xf32>
    tpu.vector_store %arg10[%c0_26, %c0_27], %55 {strides = array<i32>} : memref<8x32xf32, #tpu.memory_space<vmem>>, vector<8x32xf32>,
    return
  }
  func.func @transform_0(%arg0: i32) -> (i32, i32) {
    %c0_i32 = arith.constant 0 : i32
    %c0_i32_0 = arith.constant 0 : i32
    return %arg0, %c0_i32 : i32, i32
  }
  func.func @transform_1(%arg0: i32) -> (i32, i32) {
    %c0_i32 = arith.constant 0 : i32
    %c0_i32_0 = arith.constant 0 : i32
    return %arg0, %c0_i32 : i32, i32
  }
  func.func @transform_2(%arg0: i32) -> (i32, i32) {
    %c0_i32 = arith.constant 0 : i32
    %c0_i32_0 = arith.constant 0 : i32
    return %arg0, %c0_i32 : i32, i32
  }
  func.func @transform_3(%arg0: i32) -> (i32, i32) {
    %c0_i32 = arith.constant 0 : i32
    %c0_i32_0 = arith.constant 0 : i32
    %c0_i32_1 = arith.constant 0 : i32
    return %c0_i32, %c0_i32_0 : i32, i32
  }
  func.func @transform_4(%arg0: i32) -> (i32, i32) {
    %c0_i32 = arith.constant 0 : i32
    %c0_i32_0 = arith.constant 0 : i32
    %c0_i32_1 = arith.constant 0 : i32
    return %c0_i32, %c0_i32_0 : i32, i32
  }
  func.func @transform_5(%arg0: i32) -> (i32, i32) {
    %c0_i32 = arith.constant 0 : i32
    %c0_i32_0 = arith.constant 0 : i32
    %c0_i32_1 = arith.constant 0 : i32
    return %c0_i32, %c0_i32_0 : i32, i32
  }
  func.func @transform_6(%arg0: i32) -> (i32, i32) {
    %c0_i32 = arith.constant 0 : i32
    %c0_i32_0 = arith.constant 0 : i32
    %c0_i32_1 = arith.constant 0 : i32
    return %c0_i32, %c0_i32_0 : i32, i32
  }
  func.func @transform_7(%arg0: i32) -> (i32, i32) {
    %c0_i32 = arith.constant 0 : i32
    %c0_i32_0 = arith.constant 0 : i32
    %c0_i32_1 = arith.constant 0 : i32
    return %c0_i32, %c0_i32_0 : i32, i32
  }
  func.func @transform_8(%arg0: i32) -> (i32, i32) {
    %c0_i32 = arith.constant 0 : i32
    %c0_i32_0 = arith.constant 0 : i32
    %c0_i32_1 = arith.constant 0 : i32
    return %c0_i32, %c0_i32_0 : i32, i32
  }
  func.func @transform_9(%arg0: i32) -> (i32, i32) {
    %c0_i32 = arith.constant 0 : i32
    %c0_i32_0 = arith.constant 0 : i32
    return %arg0, %c0_i32 : i32, i32
  }
}

</mosaic_0001>

<llo_original>
// kernel: tpu_custom_call.1
$region0: #{tpu_custom_call.1}
  #allocation0 [shape = 'u32[]', space=smem, size = 0x4, offset = 0x4, fixed_abs, tag = 'smem constant byte address 0x4 - core index']
  #allocation1 [shape = 'u32[144,128]{1,0:T(1,128)}', space=vmem, size = 0x12000, scoped, tag = 'internal scratch']
  %s0 = inlined_call_operand.hbm [shape: bf16[16,32], index: 0, kind: input, shape index: {}]
  %s1 = inlined_call_operand.vmem [shape: f32[16,2], index: 1, kind: input, shape index: {}]
  %s2 = inlined_call_operand.hbm [shape: bf16[16,32], index: 2, kind: input, shape index: {}]
  %s3 = inlined_call_operand.hbm [shape: f32[3,32], index: 3, kind: input, shape index: {}]
  %s4 = inlined_call_operand.vmem [shape: bf16[32,32], index: 4, kind: input, shape index: {}]
  %s5 = inlined_call_operand.vmem [shape: bf16[32,32], index: 5, kind: input, shape index: {}]
  %s6 = inlined_call_operand.vmem [shape: f32[1,32], index: 6, kind: input, shape index: {}]
  %s7 = inlined_call_operand.vmem [shape: f32[1,32], index: 7, kind: input, shape index: {}]
  %s8 = inlined_call_operand.vmem [shape: f32[1,32], index: 8, kind: input, shape index: {}]
  %s9 = inlined_call_operand.hbm [shape: f32[16,32], index: 9, kind: output, shape index: {}]
  %s10 = sld [smem:[#allocation0]]
  $region81: #{tpu_custom_call.1} parent=0
    _
  %s12 = ssub.s32 1, %s10
  %s13 = scalar_select 0, %s12, %s10
  $region1: #{tpu_custom_call.1} parent=0
    #allocation2 [shape = 'u8[4096]{0}', space=vmem, size = 0x1000, scoped, tag = 'input window, operand 0']
    #allocation3 [shape = 's32[2]{0}', space=sflag, size = 0x8, scoped, tag = 'scoped memory for tpu_custom_call.1']
    #allocation4 [shape = 's32[2]{0}', space=sflag, size = 0x8, scoped, tag = 'scoped memory for tpu_custom_call.1']
    #allocation5 [shape = 'u8[4096]{0}', space=vmem, size = 0x1000, scoped, tag = 'input window, operand 2']
    #allocation6 [shape = 's32[2]{0}', space=sflag, size = 0x8, scoped, tag = 'scoped memory for tpu_custom_call.1']
    #allocation7 [shape = 'u8[2048]{0}', space=vmem, size = 0x800, scoped, tag = 'input window, operand 3, single buffered']
    #allocation8 [shape = 'u8[8192]{0}', space=vmem, size = 0x2000, scoped, tag = 'output window, operand 0']
    %14 = vsyncpa [#allocation3], 0
    %s15 = scalar_lea.sflag [#allocation3], 1
    %16 = vsyncpa %s15, 0
    %17 = vsyncpa [#allocation6], 0
    %s18 = scalar_lea.sflag [#allocation6], 1
    %19 = vsyncpa %s18, 0
    %20 = vsyncpa [#allocation4], 0
    %s21 = scalar_lea.sflag [#allocation4], 1
    %22 = vsyncpa %s21, 0
    loop: start=0, step=1, limit=4
    $region2: #{tpu_custom_call.1} parent=1 // loop_pre_header
      _
    $region3: #{tpu_custom_call.1} parent=1 // loop_header
      %s24 = sphi 0, %s28
      %p25 = scmp.ge.s32.totalorder %s24, 4
      %s34 = sphi 0, %s36
      %s37 = sphi 0, %s34
      %s38 = sphi 0, %s37
      %s54 = sphi 0, %s38
      %s60 = sphi 0, %s62
      %s63 = sphi 0, %s60
      %s64 = sphi 0, %s63
      %s80 = sphi 0, %s64
      %s86 = sphi 0, %s88
      %s89 = sphi 0, %s86
      %s90 = sphi 0, %s89
      %s106 = sphi 0, %s90
      %s110 = sphi 0, %s110
      %s112 = sphi 0, %s110
      %s113 = sphi 0, %s112
      %s127 = sphi 0, %s113
      %s131 = sphi 0, %s131
      %s133 = sphi 0, %s131
      %s134 = sphi 0, %s133
      %s148 = sphi 0, %s134
      %s152 = sphi 0, %s152
      %s154 = sphi 0, %s152
      %s155 = sphi 0, %s154
      %s169 = sphi 0, %s155
      %s173 = sphi 0, %s173
      %s175 = sphi 0, %s173
      %s176 = sphi 0, %s175
      %s190 = sphi 0, %s176
      %s194 = sphi 0, %s194
      %s196 = sphi 0, %s194
      %s197 = sphi 0, %s196
      %s211 = sphi 0, %s197
      %s215 = sphi 0, %s215
      %s217 = sphi 0, %s215
      %s218 = sphi 0, %s217
      %s232 = sphi 0, %s218
      %s238 = sphi 0, %s240
      %s241 = sphi 0, %s238
      %s242 = sphi 0, %s241
      %s258 = sphi 0, %s242
    $region4: #{tpu_custom_call.1} parent=1 // loop_header_branch
      %27 = sbr.rel (%p25) target = $region8
    $region5: #{tpu_custom_call.1} parent=1 // loop_body
      %s29 = ssub.s32 %s24, 1
      %s30 = ssub.s32 %s24, 2
      %s31 = sadd.s32 %s24, 1
      %s32 = ssub.s32 %s24, %s31
      %p33 = scmp.eq.s32.totalorder %s32, 0
      %s35 = sadd.s32 %s34, 1
      %s36 = scalar_select %p33, %s34, %s35
      %p39 = pneg %p33
      %p40 = scmp.eq.s32.totalorder %s24, 1
      %p41 = por %p39, %p40
      %p42 = scmp.ne.s32.totalorder %s34, %s37
      %p43 = scmp.eq.s32.totalorder %s24, 0
      %p44 = por %p42, %p43
      %p45 = scmp.ne.s32.totalorder %s34, %s37
      %p46 = scmp.eq.s32.totalorder %s29, 1
      %p47 = por %p45, %p46
      %p48 = scmp.ne.s32.totalorder %s37, %s38
      %p49 = scmp.eq.s32.totalorder %s29, 0
      %p50 = por %p48, %p49
      %p51 = scmp.ne.s32.totalorder %s37, %s38
      %p52 = scmp.eq.s32.totalorder %s30, 1
      %p53 = por %p51, %p52
      %p55 = scmp.ne.s32.totalorder %s38, %s54
      %p56 = scmp.eq.s32.totalorder %s30, 0
      %p57 = por %p55, %p56
      %s58 = ssub.s32 %s24, %s31
      %p59 = scmp.eq.s32.totalorder %s58, 0
      %s61 = sadd.s32 %s60, 1
      %s62 = scalar_select %p59, %s60, %s61
      %p65 = pneg %p59
      %p66 = scmp.eq.s32.totalorder %s24, 1
      %p67 = por %p65, %p66
      %p68 = scmp.ne.s32.totalorder %s60, %s63
      %p69 = scmp.eq.s32.totalorder %s24, 0
      %p70 = por %p68, %p69
      %p71 = scmp.ne.s32.totalorder %s60, %s63
      %p72 = scmp.eq.s32.totalorder %s29, 1
      %p73 = por %p71, %p72
      %p74 = scmp.ne.s32.totalorder %s63, %s64
      %p75 = scmp.eq.s32.totalorder %s29, 0
      %p76 = por %p74, %p75
      %p77 = scmp.ne.s32.totalorder %s63, %s64
      %p78 = scmp.eq.s32.totalorder %s30, 1
      %p79 = por %p77, %p78
      %p81 = scmp.ne.s32.totalorder %s64, %s80
      %p82 = scmp.eq.s32.totalorder %s30, 0
      %p83 = por %p81, %p82
      %s84 = ssub.s32 %s24, %s31
      %p85 = scmp.eq.s32.totalorder %s84, 0
      %s87 = sadd.s32 %s86, 1
      %s88 = scalar_select %p85, %s86, %s87
      %p91 = pneg %p85
      %p92 = scmp.eq.s32.totalorder %s24, 1
      %p93 = por %p91, %p92
      %p94 = scmp.ne.s32.totalorder %s86, %s89
      %p95 = scmp.eq.s32.totalorder %s24, 0
      %p96 = por %p94, %p95
      %p97 = scmp.ne.s32.totalorder %s86, %s89
      %p98 = scmp.eq.s32.totalorder %s29, 1
      %p99 = por %p97, %p98
      %p100 = scmp.ne.s32.totalorder %s89, %s90
      %p101 = scmp.eq.s32.totalorder %s29, 0
      %p102 = por %p100, %p101
      %p103 = scmp.ne.s32.totalorder %s89, %s90
      %p104 = scmp.eq.s32.totalorder %s30, 1
      %p105 = por %p103, %p104
      %p107 = scmp.ne.s32.totalorder %s90, %s106
      %p108 = scmp.eq.s32.totalorder %s30, 0
      %p109 = por %p107, %p108
      %s111 = sadd.s32 %s110, 1
      %p114 = scmp.eq.s32.totalorder %s24, 1
      %p115 = scmp.ne.s32.totalorder %s110, %s112
      %p116 = scmp.eq.s32.totalorder %s24, 0
      %p117 = por %p115, %p116
      %p118 = scmp.ne.s32.totalorder %s110, %s112
      %p119 = scmp.eq.s32.totalorder %s29, 1
      %p120 = por %p118, %p119
      %p121 = scmp.ne.s32.totalorder %s112, %s113
      %p122 = scmp.eq.s32.totalorder %s29, 0
      %p123 = por %p121, %p122
      %p124 = scmp.ne.s32.totalorder %s112, %s113
      %p125 = scmp.eq.s32.totalorder %s30, 1
      %p126 = por %p124, %p125
      %p128 = scmp.ne.s32.totalorder %s113, %s127
      %p129 = scmp.eq.s32.totalorder %s30, 0
      %p130 = por %p128, %p129
      %s132 = sadd.s32 %s131, 1
      %p135 = scmp.eq.s32.totalorder %s24, 1
      %p136 = scmp.ne.s32.totalorder %s131, %s133
      %p137 = scmp.eq.s32.totalorder %s24, 0
      %p138 = por %p136, %p137
      %p139 = scmp.ne.s32.totalorder %s131, %s133
      %p140 = scmp.eq.s32.totalorder %s29, 1
      %p141 = por %p139, %p140
      %p142 = scmp.ne.s32.totalorder %s133, %s134
      %p143 = scmp.eq.s32.totalorder %s29, 0
      %p144 = por %p142, %p143
      %p145 = scmp.ne.s32.totalorder %s133, %s134
      %p146 = scmp.eq.s32.totalorder %s30, 1
      %p147 = por %p145, %p146
      %p149 = scmp.ne.s32.totalorder %s134, %s148
      %p150 = scmp.eq.s32.totalorder %s30, 0
      %p151 = por %p149, %p150
      %s153 = sadd.s32 %s152, 1
      %p156 = scmp.eq.s32.totalorder %s24, 1
      %p157 = scmp.ne.s32.totalorder %s152, %s154
      %p158 = scmp.eq.s32.totalorder %s24, 0
      %p159 = por %p157, %p158
      %p160 = scmp.ne.s32.totalorder %s152, %s154
      %p161 = scmp.eq.s32.totalorder %s29, 1
      %p162 = por %p160, %p161
      %p163 = scmp.ne.s32.totalorder %s154, %s155
      %p164 = scmp.eq.s32.totalorder %s29, 0
      %p165 = por %p163, %p164
      %p166 = scmp.ne.s32.totalorder %s154, %s155
      %p167 = scmp.eq.s32.totalorder %s30, 1
      %p168 = por %p166, %p167
      %p170 = scmp.ne.s32.totalorder %s155, %s169
      %p171 = scmp.eq.s32.totalorder %s30, 0
      %p172 = por %p170, %p171
      %s174 = sadd.s32 %s173, 1
      %p177 = scmp.eq.s32.totalorder %s24, 1
      %p178 = scmp.ne.s32.totalorder %s173, %s175
      %p179 = scmp.eq.s32.totalorder %s24, 0
      %p180 = por %p178, %p179
      %p181 = scmp.ne.s32.totalorder %s173, %s175
      %p182 = scmp.eq.s32.totalorder %s29, 1
      %p183 = por %p181, %p182
      %p184 = scmp.ne.s32.totalorder %s175, %s176
      %p185 = scmp.eq.s32.totalorder %s29, 0
      %p186 = por %p184, %p185
      %p187 = scmp.ne.s32.totalorder %s175, %s176
      %p188 = scmp.eq.s32.totalorder %s30, 1
      %p189 = por %p187, %p188
      %p191 = scmp.ne.s32.totalorder %s176, %s190
      %p192 = scmp.eq.s32.totalorder %s30, 0
      %p193 = por %p191, %p192
      %s195 = sadd.s32 %s194, 1
      %p198 = scmp.eq.s32.totalorder %s24, 1
      %p199 = scmp.ne.s32.totalorder %s194, %s196
      %p200 = scmp.eq.s32.totalorder %s24, 0
      %p201 = por %p199, %p200
      %p202 = scmp.ne.s32.totalorder %s194, %s196
      %p203 = scmp.eq.s32.totalorder %s29, 1
      %p204 = por %p202, %p203
      %p205 = scmp.ne.s32.totalorder %s196, %s197
      %p206 = scmp.eq.s32.totalorder %s29, 0
      %p207 = por %p205, %p206
      %p208 = scmp.ne.s32.totalorder %s196, %s197
      %p209 = scmp.eq.s32.totalorder %s30, 1
      %p210 = por %p208, %p209
      %p212 = scmp.ne.s32.totalorder %s197, %s211
      %p213 = scmp.eq.s32.totalorder %s30, 0
      %p214 = por %p212, %p213
      %s216 = sadd.s32 %s215, 1
      %p219 = scmp.eq.s32.totalorder %s24, 1
      %p220 = scmp.ne.s32.totalorder %s215, %s217
      %p221 = scmp.eq.s32.totalorder %s24, 0
      %p222 = por %p220, %p221
      %p223 = scmp.ne.s32.totalorder %s215, %s217
      %p224 = scmp.eq.s32.totalorder %s29, 1
      %p225 = por %p223, %p224
      %p226 = scmp.ne.s32.totalorder %s217, %s218
      %p227 = scmp.eq.s32.totalorder %s29, 0
      %p228 = por %p226, %p227
      %p229 = scmp.ne.s32.totalorder %s217, %s218
      %p230 = scmp.eq.s32.totalorder %s30, 1
      %p231 = por %p229, %p230
      %p233 = scmp.ne.s32.totalorder %s218, %s232
      %p234 = scmp.eq.s32.totalorder %s30, 0
      %p235 = por %p233, %p234
      %s236 = ssub.s32 %s24, %s31
      %p237 = scmp.eq.s32.totalorder %s236, 0
      %s239 = sadd.s32 %s238, 1
      %s240 = scalar_select %p237, %s238, %s239
      %p243 = pneg %p237
      %p244 = scmp.eq.s32.totalorder %s24, 1
      %p245 = por %p243, %p244
      %p246 = scmp.ne.s32.totalorder %s238, %s241
      %p247 = scmp.eq.s32.totalorder %s24, 0
      %p248 = por %p246, %p247
      %p249 = scmp.ne.s32.totalorder %s238, %s241
      %p250 = scmp.eq.s32.totalorder %s29, 1
      %p251 = por %p249, %p250
      %p252 = scmp.ne.s32.totalorder %s241, %s242
      %p253 = scmp.eq.s32.totalorder %s29, 0
      %p254 = por %p252, %p253
      %p255 = scmp.ne.s32.totalorder %s241, %s242
      %p256 = scmp.eq.s32.totalorder %s30, 1
      %p257 = por %p255, %p256
      %p259 = scmp.ne.s32.totalorder %s242, %s258
      %p260 = scmp.eq.s32.totalorder %s30, 0
      %p261 = por %p259, %p260
      %p262 = scmp.le.s32.totalorder 1, %s24
      %p263 = scmp.lt.s32.totalorder %s24, 3
      %p264 = pnand %p262, %p263
      %p265 = pneg %p264
      // Predicated region
      $region9: #{tpu_custom_call.1} parent=5 // pred_check
        _
      $region10: #{tpu_custom_call.1} parent=5 // pred_check_branch
        %267 = sbr.rel (%p264) target = $region12
      $region11: #{tpu_custom_call.1} parent=5 // pred_region
        %s268 = ssub.s32 %s24, 1
        // Predicated region
        $region13: #{tpu_custom_call.1} parent=11 // pred_check
          %p269 = pneg %p123
        $region14: #{tpu_custom_call.1} parent=11 // pred_check_branch
          %271 = sbr.rel (%p269) target = $region16
        $region15: #{tpu_custom_call.1} parent=11 // pred_region
          %s273 = ssub.s32 64, 64
          %274 = vsyncadd [#allocation6], %s273
          %s276 = sshll.u32 [#allocation7], 4
          %s277 = int_to_ptr.vmem [resolvable:$true] %s276
          %279 = dma.hbm_to_vmem [thread:$0]  %s3, 64, %s277, [#allocation6]
        $region16: #{tpu_custom_call.1} parent=11 // pred_fallthru
          _
        // Predicated region
        $region17: #{tpu_custom_call.1} parent=11 // pred_check
          %p280 = pneg %p144
        $region18: #{tpu_custom_call.1} parent=11 // pred_check_branch
          %282 = sbr.rel (%p280) target = $region20
        $region19: #{tpu_custom_call.1} parent=11 // pred_region
          _
        $region20: #{tpu_custom_call.1} parent=11 // pred_fallthru
          _
        // Predicated region
        $region21: #{tpu_custom_call.1} parent=11 // pred_check
          %p283 = pneg %p165
        $region22: #{tpu_custom_call.1} parent=11 // pred_check_branch
          %285 = sbr.rel (%p283) target = $region24
        $region23: #{tpu_custom_call.1} parent=11 // pred_region
          _
        $region24: #{tpu_custom_call.1} parent=11 // pred_fallthru
          _
        // Predicated region
        $region25: #{tpu_custom_call.1} parent=11 // pred_check
          %p286 = pneg %p186
        $region26: #{tpu_custom_call.1} parent=11 // pred_check_branch
          %288 = sbr.rel (%p286) target = $region28
        $region27: #{tpu_custom_call.1} parent=11 // pred_region
          _
        $region28: #{tpu_custom_call.1} parent=11 // pred_fallthru
          _
        // Predicated region
        $region29: #{tpu_custom_call.1} parent=11 // pred_check
          %p289 = pneg %p207
        $region30: #{tpu_custom_call.1} parent=11 // pred_check_branch
          %291 = sbr.rel (%p289) target = $region32
        $region31: #{tpu_custom_call.1} parent=11 // pred_region
          _
        $region32: #{tpu_custom_call.1} parent=11 // pred_fallthru
          _
        // Predicated region
        $region33: #{tpu_custom_call.1} parent=11 // pred_check
          %p292 = pneg %p228
        $region34: #{tpu_custom_call.1} parent=11 // pred_check_branch
          %294 = sbr.rel (%p292) target = $region36
        $region35: #{tpu_custom_call.1} parent=11 // pred_region
          _
        $region36: #{tpu_custom_call.1} parent=11 // pred_fallthru
          _
      $region12: #{tpu_custom_call.1} parent=5 // pred_fallthru
        _
      %p295 = scmp.lt.s32.totalorder %s24, 2
      // Predicated region
      $region37: #{tpu_custom_call.1} parent=5 // pred_check
        %p296 = pneg %p295
      $region38: #{tpu_custom_call.1} parent=5 // pred_check_branch
        %298 = sbr.rel (%p296) target = $region40
      $region39: #{tpu_custom_call.1} parent=5 // pred_region
        // Predicated region
        $region41: #{tpu_custom_call.1} parent=39 // pred_check
          %p299 = pneg %p44
        $region42: #{tpu_custom_call.1} parent=39 // pred_check_branch
          %301 = sbr.rel (%p299) target = $region44
        $region43: #{tpu_custom_call.1} parent=39 // pred_region
          %s302 = sand.u32 %s34, 1
          %s303 = scalar_lea.sflag [#allocation3], %s302
          %s304 = sand.u32 %s34, 1
          %s305 = smul.addr %s304, 4
          %s306 = scalar_lea.vmem [#allocation2], %s305
          %s308 = ssub.s32 64, 64
          %309 = vsyncadd %s303, %s308
          %s310 = smul.addr %s24, 64
          %s311 = scalar_lea.hbm %s0, %s310
          %s313 = sshll.u32 %s306, 4
          %s314 = int_to_ptr.vmem [resolvable:$true] %s313
          %316 = dma.hbm_to_vmem [thread:$0]  %s311, 64, %s314, %s303
        $region44: #{tpu_custom_call.1} parent=39 // pred_fallthru
          _
        // Predicated region
        $region45: #{tpu_custom_call.1} parent=39 // pred_check
          %p317 = pneg %p70
        $region46: #{tpu_custom_call.1} parent=39 // pred_check_branch
          %319 = sbr.rel (%p317) target = $region48
        $region47: #{tpu_custom_call.1} parent=39 // pred_region
          %p320 = scmp.lt.s32.totalorder %s24, 1
          %s321 = scalar_select %p320, %s24, 1
          %s322 = smul.addr %s321, 8
          %s323 = scalar_lea.vmem %s1, %s322
        $region48: #{tpu_custom_call.1} parent=39 // pred_fallthru
          _
        // Predicated region
        $region49: #{tpu_custom_call.1} parent=39 // pred_check
          %p324 = pneg %p96
        $region50: #{tpu_custom_call.1} parent=39 // pred_check_branch
          %326 = sbr.rel (%p324) target = $region52
        $region51: #{tpu_custom_call.1} parent=39 // pred_region
          %s327 = sand.u32 %s24, 1
          %s328 = scalar_lea.sflag [#allocation6], %s327
          %s329 = sand.u32 %s86, 1
          %s330 = smul.addr %s329, 4
          %s331 = scalar_lea.vmem [#allocation5], %s330
          %s333 = ssub.s32 64, 64
          %334 = vsyncadd %s328, %s333
          %s335 = smul.addr %s24, 64
          %s336 = scalar_lea.hbm %s2, %s335
          %s338 = sshll.u32 %s331, 4
          %s339 = int_to_ptr.vmem [resolvable:$true] %s338
          %341 = dma.hbm_to_vmem [thread:$0]  %s336, 64, %s339, %s328
        $region52: #{tpu_custom_call.1} parent=39 // pred_fallthru
          _
      $region40: #{tpu_custom_call.1} parent=5 // pred_fallthru
        _
      %p342 = scmp.le.s32.totalorder 1, %s24
      %p343 = scmp.lt.s32.totalorder %s24, 3
      %p344 = pnand %p342, %p343
      %p345 = pneg %p344
      // Predicated region
      $region53: #{tpu_custom_call.1} parent=5 // pred_check
        _
      $region54: #{tpu_custom_call.1} parent=5 // pred_check_branch
        %347 = sbr.rel (%p344) target = $region56
      $region55: #{tpu_custom_call.1} parent=5 // pred_region
        %s348 = ssub.s32 %s24, 1
        %s349 = sand.u32 %s37, 1
        %s350 = scalar_lea.sflag [#allocation3], %s349
        %s351 = sand.u32 %s37, 1
        %s352 = smul.addr %s351, 4
        %s353 = scalar_lea.vmem [#allocation2], %s352
        // Predicated region
        $region57: #{tpu_custom_call.1} parent=55 // pred_check
          %p354 = pneg %p50
        $region58: #{tpu_custom_call.1} parent=55 // pred_check_branch
          %356 = sbr.rel (%p354) target = $region60
        $region59: #{tpu_custom_call.1} parent=55 // pred_region
          %357 = dma.done %s350, 64
        $region60: #{tpu_custom_call.1} parent=55 // pred_fallthru
          _
        %s358 = sand.u32 %s29, 1
        %s359 = scalar_lea.sflag [#allocation6], %s358
        %s360 = sand.u32 %s89, 1
        %s361 = smul.addr %s360, 4
        %s362 = scalar_lea.vmem [#allocation5], %s361
        // Predicated region
        $region61: #{tpu_custom_call.1} parent=55 // pred_check
          %p363 = pneg %p102
        $region62: #{tpu_custom_call.1} parent=55 // pred_check_branch
          %365 = sbr.rel (%p363) target = $region64
        $region63: #{tpu_custom_call.1} parent=55 // pred_region
          %366 = dma.done %s359, 64
        $region64: #{tpu_custom_call.1} parent=55 // pred_fallthru
          _
        // Predicated region
        $region65: #{tpu_custom_call.1} parent=55 // pred_check
          %p367 = pneg %p123
        $region66: #{tpu_custom_call.1} parent=55 // pred_check_branch
          %369 = sbr.rel (%p367) target = $region68
        $region67: #{tpu_custom_call.1} parent=55 // pred_region
          %370 = dma.done [#allocation6], 64
        $region68: #{tpu_custom_call.1} parent=55 // pred_fallthru
          _
        %s371 = sand.u32 %s37, 1
        %s372 = scalar_lea.sflag [#allocation3], %s371
        %s373 = sand.u32 %s37, 1
        %s374 = smul.addr %s373, 4
        %s375 = scalar_lea.vmem [#allocation2], %s374
        %p376 = pneg %p50
        %p377 = pneg %p47
        %p378 = scmp.lt.s32.totalorder %s29, 1
        %s379 = scalar_select %p378, %s29, 1
        %s380 = smul.addr %s379, 8
        %s381 = scalar_lea.vmem %s1, %s380
        %p382 = pneg %p76
        %p383 = pneg %p73
        %s384 = sand.u32 %s29, 1
        %s385 = scalar_lea.sflag [#allocation6], %s384
        %s386 = sand.u32 %s89, 1
        %s387 = smul.addr %s386, 4
        %s388 = scalar_lea.vmem [#allocation5], %s387
        %p389 = pneg %p102
        %p390 = pneg %p99
        %p391 = pneg %p123
        %p392 = pneg %p120
        %p393 = pneg %p144
        %p394 = pneg %p141
        %p395 = pneg %p165
        %p396 = pneg %p162
        %p397 = pneg %p186
        %p398 = pneg %p183
        %p399 = pneg %p207
        %p400 = pneg %p204
        %p401 = pneg %p228
        %p402 = pneg %p225
        %p403 = pneg %p254
        %p404 = pneg %p251
        %s405 = sand.u32 %s241, 1
        %s406 = scalar_lea.sflag [#allocation4], %s405
        %s407 = sand.u32 %s241, 1
        %s408 = smul.addr %s407, 8
        %s409 = scalar_lea.vmem [#allocation8], %s408
        %p410 = scmp.lt.s32.totalorder %s29, 1
        %s411 = scalar_select %p410, %s29, 1
        %s412 = smul.addr %s411, 8
        %s413 = scalar_lea.vmem %s1, %s412
        %v415 = vld [vmem:[%s413] sm:$0xff]
        %v416 = vld [vmem:[#allocation7] sm:$0x1]
        %418 = vset.pattern.permute.xlu0 0
        %419 = vperm.xlu0 %418, %v415
        %v420 = vpop.permute.xlu0 %419
        %v422 = vlaneseq
        %v423 = vshrl.u32 %v422, 7
        %v424 = vsub.s32 0, %v423
        %v425 = vrot.slane %v416, %v424
        %v426 = vmul.f32 %v420, %v425
        %v427 = vld [vmem:[#allocation7 + $0x1] sm:$0x1]
        %428 = vset.pattern.permute.xlu0 1
        %429 = vperm.xlu0 %428, %v415
        %v430 = vpop.permute.xlu0 %429
        %v432 = vlaneseq
        %v433 = vshrl.u32 %v432, 7
        %v434 = vsub.s32 0, %v433
        %v435 = vrot.slane %v427, %v434
        %v436 = vmul.f32 %v430, %v435
        %v437 = vadd.f32 %v426, %v436
        %v438 = vld [vmem:[#allocation7 + $0x2] sm:$0x1]
        %v439 = vlaneseq
        %v440 = vshrl.u32 %v439, 7
        %v441 = vsub.s32 0, %v440
        %v442 = vrot.slane %v438, %v441
        %v443 = vadd.f32 %v437, %v442
        %v444 = vand.u32 2147483647, %v443
        %vm445 = vcmp.le.f32.partialorder %v444, 0.7853982
        %vm446 = vcmp.lt.s32.totalorder %v443, 0
        %v447 = vand.u32 %v443, 2139095040
        %v448 = vshrl.u32 %v447, 23
        %v449 = vsub.s32 %v448, 127
        %v450 = vand.u32 2147483647, %v443
        %v451 = vand.u32 %v450, 8388607
        %v452 = vor.u32 %v451, 8388608
        %v453 = vsub.s32 0, %v452
        %v454 = vadd.s32 %v449, 1
        %vm455 = vcmp.gt.s32.totalorder %v454, 0
        %v456 = vsel %vm455, %v454, 0
        %v457 = vshrl.u32 %v456, 5
        %v458 = vand.u32 %v456, 31
        %v459 = vsub.s32 32, %v458
        %v460 = vshrl.u32 683565275, %v459
        %v461 = vshll.u32 683565275, %v458
        %v462 = vshrl.u32 2475754826, %v459
        %v463 = vor.u32 %v461, %v462
        %v464 = vshll.u32 2475754826, %v458
        %v465 = vshrl.u32 2131351028, %v459
        %v466 = vor.u32 %v464, %v465
        %v467 = vshll.u32 2131351028, %v458
        %v468 = vshrl.u32 2102212464, %v459
        %v469 = vor.u32 %v467, %v468
        %v470 = vshll.u32 2102212464, %v458
        %v471 = vshrl.u32 920167782, %v459
        %v472 = vor.u32 %v470, %v471
        %v473 = vshll.u32 920167782, %v458
        %v474 = vshrl.u32 1326507024, %v459
        %v475 = vor.u32 %v473, %v474
        %vm476 = vcmp.lt.s32.totalorder %v457, 1
        %vm477 = vcmp.lt.s32.totalorder %v457, 2
        %vm478 = vcmp.lt.s32.totalorder %v457, 3
        %vm479 = vcmp.lt.s32.totalorder %v457, 4
        %v480 = vsel %vm476, %v460, %v463
        %v481 = vsel %vm479, %v469, 2102212464
        %v482 = vsel %vm478, %v466, %v481
        %v483 = vsel %vm477, %v480, %v482
        %v484 = vsel %vm476, %v463, %v466
        %v485 = vsel %vm479, %v472, 920167782
        %v486 = vsel %vm478, %v469, %v485
        %v487 = vsel %vm477, %v484, %v486
        %v488 = vsel %vm476, %v466, %v469
        %v489 = vsel %vm479, %v475, 1326507024
        %v490 = vsel %vm478, %v472, %v489
        %v491 = vsel %vm477, %v488, %v490
        %v492 = vshll.u32 %v452, 8
        %v493 = vmul.u32.u64.compose %v492, %v491
        %v494 = vextract.low.u32 %v493
        %v495 = vextract.high.u32 %v493
        %v496 = vmul.u32.u64.compose %v492, %v487
        %v497 = vextract.low.u32 %v496
        %v498 = vextract.high.u32 %v496
        %v499 = vmul.u32 %v492, %v483
        %v500 = vadd.s32 %v495, %v497
        %vm501 = vc.u32 %v495, %v497
        %v502 = vadd.s32 %v498, 1
        %v503 = vsel %vm501, %v502, %v498
        %v504 = vadd.s32 %v499, %v503
        %v505 = vadd.s32 %v504, 536870912
        %v506 = vshrl.u32 %v505, 30
        %v507 = vshll.u32 %v506, 30
        %v508 = vsub.s32 %v504, %v507
        %vm509 = vcmp.lt.s32.totalorder %v508, 0
        %v510 = vsub.s32 0, %v508
        %v511 = vsel %vm509, %v510, %v508
        %v512 = vclz %v511
        %v513 = vsub.s32 %v512, 2
        %vm514 = vcmp.gt.s32.totalorder 0, %v513
        %v515 = vsel %vm514, 0, %v513
        %v516 = vsub.s32 32, %v515
        %v517 = vshll.u32 %v508, %v515
        %v518 = vshrl.u32 %v500, %v516
        %v519 = vor.u32 %v517, %v518
        %v520 = vsub.s32 4294967266, %v515
        %v521 = vadd.s32 %v520, 127
        %v522 = vshll.u32 %v521, 23
        %v523 = vor.u32 4788187, %v522
        %v524 = vand.u32 2147483647, %v523
        %v526 = vcvt.s32.f32 %v519
        %v527 = vmul.f32 %v526, %v524
        %v528 = vxor.u32 %v527, 2147483648
        %v529 = vsel %vm446, %v528, %v527
        %v530 = vsub.s32 4, %v506
        %v531 = vsel %vm446, %v530, %v506
        %v532 = vsel %vm445, %v443, %v529
        %v533 = vsel %vm445, 0, %v531
        %v534 = vcosq.f32.pop %v532
        %v535 = vsinq.f32.pop %v532
        %vm536 = vweird.f32 %v443
        %v537 = vadd.s32 %v533, 3
        %v538 = vand.u32 %v537, 3
        %vm539 = vcmp.lt.s32.totalorder %v538, 2
        %vm540 = vcmp.eq.s32.totalorder %v538, 0
        %v541 = vxor.u32 %v535, 2147483648
        %v542 = vsel %vm540, %v534, %v541
        %vm543 = vcmp.eq.s32.totalorder %v538, 2
        %v544 = vxor.u32 %v534, 2147483648
        %v545 = vsel %vm543, %v544, %v535
        %v546 = vsel %vm539, %v542, %v545
        %v547 = vsel %vm536, nan, %v546
        %v548 = vld [vmem:[%s353] sm:$0xf]
        %v549 = vld [vmem:[%s4] sm:$0xf]
        %v550 = vld [vmem:[%s4 + $0x4] sm:$0xf]
        %v551 = vld [vmem:[%s4 + $0x8] sm:$0xf]
        %v552 = vld [vmem:[%s4 + $0xc] sm:$0xf]
        %v553 = vpack.c.bf16 %v547, %v547
        %v554 = vld [vmem:[%s5] sm:$0xf]
        %v555 = vld [vmem:[%s5 + $0x4] sm:$0xf]
        %v556 = vld [vmem:[%s5 + $0x8] sm:$0xf]
        %v557 = vld [vmem:[%s5 + $0xc] sm:$0xf]
        %v562 = vunpack.c.l.b16 %v554
        %v563 = vunpack.c.l.b16 %v555
        %v564 = vunpack.c.l.b16 %v556
        %v565 = vunpack.c.l.b16 %v557
        %v566 = vpack.c.b16 %v563, %v562
        %v567 = vpack.c.b16 %v565, %v564
        %vm570 = vcmask 261120
        %v572 = vsel %vm570, %v553, 0
        %574 = vmatprep.subr.bf16.mxu0 0
        %575 = vmatpush1.bf16.msra.mxu0 %v566
        %576 = vmatprep.subr.bf16.mxu0 0
        %577 = vmatpush1.bf16.msra.mxu0 %v567
        %578 = vmatprep.subr.bf16.mxu0 0
        %579 = vmatpush1.bf16.msra.mxu0 0
        %580 = vmatprep.subr.bf16.mxu0 0
        %581 = vmatpush1.bf16.msra.mxu0 0
        %582 = vmatprep.subr.bf16.mxu0 0
        %583 = vmatpush1.bf16.msra.mxu0 0
        %584 = vmatprep.subr.bf16.mxu0 0
        %585 = vmatpush1.bf16.msra.mxu0 0
        %586 = vmatprep.subr.bf16.mxu0 0
        %587 = vmatpush1.bf16.msra.mxu0 0
        %588 = vmatprep.subr.bf16.mxu0 0
        %589 = vmatpush1.bf16.msra.mxu0 0
        %590 = vmatprep.subr.bf16.mxu0 0
        %591 = vmatpush1.bf16.msra.mxu0 0
        %592 = vmatprep.subr.bf16.mxu0 0
        %593 = vmatpush1.bf16.msra.mxu0 0
        %594 = vmatprep.subr.bf16.mxu0 0
        %595 = vmatpush1.bf16.msra.mxu0 0
        %596 = vmatprep.subr.bf16.mxu0 0
        %597 = vmatpush1.bf16.msra.mxu0 0
        %598 = vmatprep.subr.bf16.mxu0 0
        %599 = vmatpush1.bf16.msra.mxu0 0
        %600 = vmatprep.subr.bf16.mxu0 0
        %601 = vmatpush1.bf16.msra.mxu0 0
        %602 = vmatprep.subr.bf16.mxu0 0
        %603 = vmatpush1.bf16.msra.mxu0 0
        %604 = vmatprep.subr.bf16.mxu0 0
        %605 = vmatpush1.bf16.msra.mxu0 0
        %606 = vmatprep.mubr.bf16.mxu0 0
        %607 = vmatmul.mubr.bf16.gmra.mrb[0].mxu0 %v572
        %v608 = vpop.f32.mrb[0].mxu0
        %v609 = vadd.f32 0.0, %v608
        %v610 = vpop.f32.mrb[0].mxu0
        %v611 = vpop.f32.mrb[0].mxu0
        %v612 = vpop.f32.mrb[0].mxu0
        %613 = vdwg.mxu0
        %v618 = vunpack.c.l.b16 %v549
        %v619 = vunpack.c.l.b16 %v550
        %v620 = vunpack.c.l.b16 %v551
        %v621 = vunpack.c.l.b16 %v552
        %v622 = vpack.c.b16 %v619, %v618
        %v623 = vpack.c.b16 %v621, %v620
        %v627 = vsel %vm570, %v548, 0
        %629 = vmatprep.subr.bf16.mxu0 0
        %630 = vmatpush1.bf16.msra.mxu0 %v622
        %631 = vmatprep.subr.bf16.mxu0 0
        %632 = vmatpush1.bf16.msra.mxu0 %v623
        %633 = vmatprep.subr.bf16.mxu0 0
        %634 = vmatpush1.bf16.msra.mxu0 0
        %635 = vmatprep.subr.bf16.mxu0 0
        %636 = vmatpush1.bf16.msra.mxu0 0
        %637 = vmatprep.subr.bf16.mxu0 0
        %638 = vmatpush1.bf16.msra.mxu0 0
        %639 = vmatprep.subr.bf16.mxu0 0
        %640 = vmatpush1.bf16.msra.mxu0 0
        %641 = vmatprep.subr.bf16.mxu0 0
        %642 = vmatpush1.bf16.msra.mxu0 0
        %643 = vmatprep.subr.bf16.mxu0 0
        %644 = vmatpush1.bf16.msra.mxu0 0
        %645 = vmatprep.subr.bf16.mxu0 0
        %646 = vmatpush1.bf16.msra.mxu0 0
        %647 = vmatprep.subr.bf16.mxu0 0
        %648 = vmatpush1.bf16.msra.mxu0 0
        %649 = vmatprep.subr.bf16.mxu0 0
        %650 = vmatpush1.bf16.msra.mxu0 0
        %651 = vmatprep.subr.bf16.mxu0 0
        %652 = vmatpush1.bf16.msra.mxu0 0
        %653 = vmatprep.subr.bf16.mxu0 0
        %654 = vmatpush1.bf16.msra.mxu0 0
        %655 = vmatprep.subr.bf16.mxu0 0
        %656 = vmatpush1.bf16.msra.mxu0 0
        %657 = vmatprep.subr.bf16.mxu0 0
        %658 = vmatpush1.bf16.msra.mxu0 0
        %659 = vmatprep.subr.bf16.mxu0 0
        %660 = vmatpush1.bf16.msra.mxu0 0
        %661 = vmatprep.mubr.bf16.mxu0 0
        %662 = vmatmul.mubr.bf16.gmra.mrb[0].mxu0 %v627
        %v663 = vpop.f32.mrb[0].mxu0
        %v664 = vadd.f32 %v609, %v663
        %v665 = vpop.f32.mrb[0].mxu0
        %v666 = vpop.f32.mrb[0].mxu0
        %v667 = vpop.f32.mrb[0].mxu0
        %668 = vdwg.mxu0
        %v669 = vld [vmem:[%s6] sm:$0x1]
        %v671 = vlaneseq
        %v672 = vshrl.u32 %v671, 7
        %v673 = vsub.s32 0, %v672
        %v674 = vrot.slane %v669, %v673
        %v676 = vadd.f32 %v664, %v674
        %v677 = vtanh.pop %v676
        %v678 = vld [vmem:[%s362] sm:$0xf]
        %v679 = vunpack.c.l.bf16 %v678
        %v680 = vadd.f32 %v677, %v679
        %v681 = vsel %vm570, %v680, 0.0
        %682 = vadd.xlane.f32.xlu0 %v681
        %v683 = vpop.xlane.xlu0 %682
        %v684 = vrcp.pop 32.0
        %v685 = vmul.f32 %v683, %v684
        %v686 = vmul.f32 %v680, %v680
        %v687 = vsel %vm570, %v686, 0.0
        %688 = vadd.xlane.f32.xlu0 %v687
        %v689 = vpop.xlane.xlu0 %688
        %v690 = vmul.f32 %v689, %v684
        %v691 = vmul.f32 %v685, %v685
        %v692 = vsub.f32 %v690, %v691
        %v693 = vmax.f32 %v692, 0.0
        %v694 = vadd.f32 %v693, 1e-12
        %v695 = vrsqrt.pop %v694
        %v696 = vsub.f32 %v680, %v685
        %v697 = vmul.f32 %v696, %v695
        %v698 = vld [vmem:[%s7] sm:$0x1]
        %v700 = vlaneseq
        %v701 = vshrl.u32 %v700, 7
        %v702 = vsub.s32 0, %v701
        %v703 = vrot.slane %v698, %v702
        %v705 = vmul.f32 %v697, %v703
        %v706 = vld [vmem:[%s8] sm:$0x1]
        %v708 = vlaneseq
        %v709 = vshrl.u32 %v708, 7
        %v710 = vsub.s32 0, %v709
        %v711 = vrot.slane %v706, %v710
        %v713 = vadd.f32 %v705, %v711
        %714 = vst.msk [vmem:[%s409] sm:$0xff] %vm570, %v713
        %s715 = sand.u32 %s241, 1
        %s716 = scalar_lea.sflag [#allocation4], %s715
        %s717 = sand.u32 %s241, 1
        %s718 = smul.addr %s717, 8
        %s719 = scalar_lea.vmem [#allocation8], %s718
        // Predicated region
        $region69: #{tpu_custom_call.1} parent=55 // pred_check
          %p720 = pneg %p251
        $region70: #{tpu_custom_call.1} parent=55 // pred_check_branch
          %722 = sbr.rel (%p720) target = $region72
        $region71: #{tpu_custom_call.1} parent=55 // pred_region
          %s724 = ssub.s32 128, 128
          %725 = vsyncadd %s716, %s724
          %s726 = smul.addr %s29, 128
          %s727 = scalar_lea.hbm %s9, %s726
          %s729 = sshll.u32 %s719, 4
          %s730 = int_to_ptr.vmem [resolvable:$true] %s729
          %732 = dma.vmem_to_hbm [thread:$0]  %s730, 128, %s727, %s716
        $region72: #{tpu_custom_call.1} parent=55 // pred_fallthru
          _
      $region56: #{tpu_custom_call.1} parent=5 // pred_fallthru
        _
      %p733 = scmp.le.s32.totalorder 2, %s24
      // Predicated region
      $region73: #{tpu_custom_call.1} parent=5 // pred_check
        %p734 = pneg %p733
      $region74: #{tpu_custom_call.1} parent=5 // pred_check_branch
        %736 = sbr.rel (%p734) target = $region76
      $region75: #{tpu_custom_call.1} parent=5 // pred_region
        %s737 = ssub.s32 %s24, 2
        // Predicated region
        $region77: #{tpu_custom_call.1} parent=75 // pred_check
          %p738 = pneg %p257
        $region78: #{tpu_custom_call.1} parent=75 // pred_check_branch
          %740 = sbr.rel (%p738) target = $region80
        $region79: #{tpu_custom_call.1} parent=75 // pred_region
          %s741 = sand.u32 %s242, 1
          %s742 = scalar_lea.sflag [#allocation4], %s741
          %s743 = sand.u32 %s242, 1
          %s744 = smul.addr %s743, 8
          %s745 = scalar_lea.vmem [#allocation8], %s744
          %746 = dma.done %s742, 128
        $region80: #{tpu_custom_call.1} parent=75 // pred_fallthru
          _
      $region76: #{tpu_custom_call.1} parent=5 // pred_fallthru
        _
    $region6: #{tpu_custom_call.1} parent=1 // loop_footer
      %s28 = sadd.s32 1, %s24
    $region7: #{tpu_custom_call.1} parent=1 // loop_footer_branch
      %23 = sbr.rel target = $region3
    $region8: #{tpu_custom_call.1} parent=1 // loop_exit
      _
    %747 = vsyncpa [#allocation3], 1
    %s748 = scalar_lea.sflag [#allocation3], 1
    %749 = vsyncpa %s748, 1
    %750 = vsyncpa [#allocation6], 1
    %s751 = scalar_lea.sflag [#allocation6], 1
    %752 = vsyncpa %s751, 1
    %753 = vsyncpa [#allocation4], 1
    %s754 = scalar_lea.sflag [#allocation4], 1
    %755 = vsyncpa %s754, 1

</llo_original>
